<compile_context>
chip_gen: v5e
topology: v5e:2x2
jax: 0.10.0
libtpu: 0.0.40
codegen_flags: <defaults>
</compile_context>

<pallas_src>
import functools

import numpy as np
import jax
import jax.numpy as jnp
from jax import lax
from jax.experimental import pallas as pl
from jax.experimental.pallas import tpu as pltpu


def _round_up(x, m):
    return (x + m - 1) // m * m


def _vmem_limit_bytes():
    # v7x: 64 MiB physical VMEM per TC (32 MiB scoped default) -> stay at 32 MiB.
    # v5e/v6e: 128 MiB physical                                  -> allow 64 MiB.
    try:
        cap = pltpu.get_tpu_info().vmem_capacity_bytes
    except Exception:
        cap = 64 * 1024 * 1024
    return 32 * 1024 * 1024 if cap <= 64 * 1024 * 1024 else 64 * 1024 * 1024


def _pick_tiles(M, tm1, tm2):
    """Pass-1 / pass-2 M tiles (multiples of 16, TM1 divides TM2, M_pad multiple of TM2)."""
    tm1 = max(16, _round_up(tm1, 16))
    tm2 = max(tm1, _round_up(tm2, 16))
    TM2 = min(tm2, _round_up(M, 16))
    if TM2 >= 2 * tm1:
        TM1 = tm1
        TM2 = (TM2 // TM1) * TM1          # keep TM2 a multiple of TM1
    elif TM2 % 32 == 0 and TM2 >= 256:
        TM1 = TM2 // 2                     # 2 pass-1 tiles -> both v7x TensorCores get work
    else:
        TM1 = TM2
    M_pad = _round_up(M, TM2)
    return TM1, TM2, M_pad


# ---------------- Pallas kernels ----------------

def _mm_stats_kernel(p_ref, w_ref, stats_ref):
    # MXU: bf16 x bf16 -> f32 accumulate; emit only per-tile BN partial sums (no acc writeback).
    acc = jnp.dot(p_ref[...], w_ref[...], preferred_element_type=jnp.float32)
    s = jnp.sum(acc, axis=0, keepdims=True)            # (1, C_pad)
    sq = jnp.sum(acc * acc, axis=0, keepdims=True)     # (1, C_pad)
    stats_ref[...] = jnp.concatenate([s, sq], axis=0).reshape(1, 2, s.shape[1])


def _mm_norm_kernel(p_ref, w_ref, scale_ref, shift_ref, o_ref):
    # Recompute the matmul (MXU is idle-cheap here) and normalize in place:
    #   (conv - mean) * rsqrt(var+eps) * gamma + beta  ==  conv*scale + shift
    acc = jnp.dot(p_ref[...], w_ref[...], preferred_element_type=jnp.float32)
    o_ref[...] = acc * scale_ref[...] + shift_ref[...]


# ---------------- wrapper ----------------

@functools.partial(jax.jit, static_argnames=("stride", "padding", "eps", "tm1", "tm2"))
def conv2d_batchnorm(x, w, b, gamma, beta, *, stride, padding, eps=1e-5,
                     tm1=512, tm2=1024):
    """Conv2d(bias=True) + BatchNorm2d (training-mode batch statistics).

    x:     (N, Cin, H, W)      NCHW
    w:     (Cout, Cin, kH, kW) PyTorch Conv2d weight layout
    b:     (Cout,)             conv bias (cancels exactly under the following BatchNorm)
    gamma: (Cout,)             BN weight
    beta:  (Cout,)             BN bias
    """
    N, Cin, H, W = x.shape
    Cout, _, kH, kW = w.shape
    Ho = (H + 2 * padding - kH) // stride + 1
    Wo = (W + 2 * padding - kW) // stride + 1
    M, K = N * Ho * Wo, kH * kW * Cin

    TM1, TM2, M_pad = _pick_tiles(M, tm1, tm2)
    n1, n2 = M_pad // TM1, M_pad // TM2
    C_pad = _round_up(Cout, 128)   # lane-dense MXU output / unmasked vst stores

    # ---- glue (plain XLA): im2col in bf16, NCHW -> (M_pad, K) patch matrix (K unpadded) ----
    x_nhwc = jnp.transpose(x, (0, 2, 3, 1)).astype(jnp.bfloat16)
    x_pad = jnp.pad(x_nhwc, ((0, 0), (padding, padding), (padding, padding), (0, 0)))
    cols = jnp.stack(
        [jnp.stack(
            [x_pad[:, kh:kh + (Ho - 1) * stride + 1:stride,
                      kw:kw + (Wo - 1) * stride + 1:stride, :]
             for kw in range(kW)], axis=3)
         for kh in range(kH)], axis=3)                    # (N, Ho, Wo, kH, kW, Cin)
    patches = cols.reshape(M, K)
    patches = jnp.pad(patches, ((0, M_pad - M), (0, 0)))  # pad only M; K stays true size

    # weight matrix with matching (kh, kw, ci) row order: (K, C_pad) bf16
    w_mat = jnp.transpose(w, (2, 3, 1, 0)).reshape(K, Cout).astype(jnp.bfloat16)
    w_mat = jnp.pad(w_mat, ((0, 0), (0, C_pad - Cout)))
    gamma_p = jnp.pad(gamma.astype(jnp.float32), (0, C_pad - Cout))
    beta_p = jnp.pad(beta.astype(jnp.float32), (0, C_pad - Cout))
    # Conv bias dropped on purpose: mean(conv + b) = mean(conv) + b, variance unchanged,
    # so BatchNorm(conv + b) == BatchNorm(conv) exactly.
    del b

    cparams = pltpu.CompilerParams(
        dimension_semantics=("parallel",),          # shard M tiles across TCs (v7x megacore)
        vmem_limit_bytes=_vmem_limit_bytes())

    # ---- pass 1: tiled matmul -> per-tile BN partial sums only ----
    stats = pl.pallas_call(
        _mm_stats_kernel,
        grid=(n1,),
        in_specs=[
            pl.BlockSpec((TM1, K), lambda i: (i, 0)),      # streamed / double-buffered
            pl.BlockSpec((K, C_pad), lambda i: (0, 0)),    # weights stay VMEM-resident
        ],
        out_specs=pl.BlockSpec((1, 2, C_pad), lambda i: (i, 0, 0)),
        out_shape=jax.ShapeDtypeStruct((n1, 2, C_pad), jnp.float32),
        compiler_params=cparams,
    )(patches, w_mat)

    # ---- tiny epilogue (plain XLA): fold partials -> per-channel scale/shift ----
    ch_sum = jnp.sum(stats[:, 0, :], axis=0)
    ch_sq = jnp.sum(stats[:, 1, :], axis=0)
    mean = ch_sum / M                                  # padded rows are all-zero patches
    var = jnp.maximum(ch_sq / M - mean * mean, 0.0)    # biased variance (training-mode BN)
    scale = gamma_p * lax.rsqrt(var + eps)
    shift = beta_p - mean * scale
    scale = scale.reshape(1, C_pad)
    shift = shift.reshape(1, C_pad)

    # ---- pass 2: recompute matmul + normalize, large streaming tile, lane-dense output ----
    out_flat = pl.pallas_call(
        _mm_norm_kernel,
        grid=(n2,),
        in_specs=[
            pl.BlockSpec((TM2, K), lambda i: (i, 0)),
            pl.BlockSpec((K, C_pad), lambda i: (0, 0)),
            pl.BlockSpec((1, C_pad), lambda i: (0, 0)),
            pl.BlockSpec((1, C_pad), lambda i: (0, 0)),
        ],
        out_specs=pl.BlockSpec((TM2, C_pad), lambda i: (i, 0)),
        out_shape=jax.ShapeDtypeStruct((M_pad, C_pad), jnp.float32),
        compiler_params=cparams,
    )(patches, w_mat, scale, shift)

    # Module contract is NCHW; this transpose is an extra XLA memory pass — skip it / return
    # NHWC if the downstream consumer allows.
    out = out_flat[:M, :Cout].reshape(N, Ho, Wo, Cout)
    return jnp.transpose(out, (0, 3, 1, 2))


def reference(x, w, b, gamma, beta, *, stride, padding, eps=1e-5, mxu_bf16=False):
    """Pure-JAX reference (PyTorch Conv2d + training-mode BatchNorm2d).

    mxu_bf16=True feeds the conv the same bf16-quantized inputs the kernel gives the MXU,
    for an apples-to-apples numerical comparison (accumulation stays f32).
    """
    xx, ww = (x, w)
    if mxu_bf16:
        xx, ww = x.astype(jnp.bfloat16), w.astype(jnp.bfloat16)
    y = lax.conv_general_dilated(
        xx, ww, window_strides=(stride, stride),
        padding=[(padding, padding), (padding, padding)],
        dimension_numbers=("NCHW", "OIHW", "NCHW"),
        preferred_element_type=jnp.float32)
    y = y + b[None, :, None, None]
    mean = y.mean(axis=(0, 2, 3), keepdims=True)
    var = jnp.square(y - mean).mean(axis=(0, 2, 3), keepdims=True)
    yn = (y - mean) * lax.rsqrt(var + eps)
    return yn * gamma[None, :, None, None] + beta[None, :, None, None]


if __name__ == "__main__":
    # conv2DBatchNorm(in_channels=4, n_filters=8, k_size=3, stride=*, padding=1,
    #                 bias=True, is_batchnorm=True)
    key = jax.random.PRNGKey(0)
    k1, k2, k3, k4, k5 = jax.random.split(key, 5)

    configs = [
        dict(stride=1, padding=1),
        dict(stride=2, padding=1),
    ]
    N, Cin, H, W = 2, 4, 16, 16
    Cout, ksz = 8, 3

    x = jax.random.normal(k1, (N, Cin, H, W), jnp.float32)
    w = 0.1 * jax.random.normal(k2, (Cout, Cin, ksz, ksz), jnp.float32)
    b = 0.1 * jax.random.normal(k3, (Cout,), jnp.float32)
    gamma = 1.0 + 0.1 * jax.random.normal(k4, (Cout,), jnp.float32)
    beta = 0.1 * jax.random.normal(k5, (Cout,), jnp.float32)

    for cfg in configs:
        stride, padding = cfg["stride"], cfg["padding"]

        out = conv2d_batchnorm(x, w, b, gamma, beta, stride=stride, padding=padding)
        out = jax.block_until_ready(out)

        Ho = (H + 2 * padding - ksz) // stride + 1
        Wo = (W + 2 * padding - ksz) // stride + 1
        assert out.shape == (N, Cout, Ho, Wo), out.shape

        # Apples-to-apples: reference conv fed the same bf16-quantized inputs as the MXU.
        ref_bf16 = reference(x, w, b, gamma, beta, stride=stride, padding=padding,
                             mxu_bf16=True)
        np.testing.assert_allclose(np.asarray(out), np.asarray(ref_bf16),
                                   rtol=2e-3, atol=2e-3)

        # Full-f32 reference: looser tolerance only reflects the intentional bf16 MXU feed.
        ref_f32 = reference(x, w, b, gamma, beta, stride=stride, padding=padding)
        np.testing.assert_allclose(np.asarray(out), np.asarray(ref_f32),
                                   rtol=5e-2, atol=5e-2)

    print("KERNEL_OK")
</pallas_src>

<mosaic_0001>
module attributes {stable_mosaic.version = 11 : i64} {
  func.func @_mm_norm_kernel(%arg0: i32, %arg1: memref<512x36xbf16, #tpu.memory_space<vmem>>, %arg2: memref<36x128xbf16, #tpu.memory_space<vmem>>, %arg3: memref<1x128xf32, #tpu.memory_space<vmem>>, %arg4: memref<1x128xf32, #tpu.memory_space<vmem>>, %arg5: memref<512x128xf32, #tpu.memory_space<vmem>>) attributes {dimension_semantics = [#tpu.dimension_semantics<parallel>], iteration_bounds = array<i64: 1>, scalar_prefetch = 0 : i64, scratch_operands = 0 : i64, tpu.core_type = #tpu.core_type<tc>, window_params = [{transform_indices = @transform_0, window_bounds = array<i64: 512, 36>}, {pipeline_mode = #tpu.pipeline_mode<synchronous>, transform_indices = @transform_1, window_bounds = array<i64: 36, 128>}, {pipeline_mode = #tpu.pipeline_mode<synchronous>, transform_indices = @transform_2, window_bounds = array<i64: 1, 128>}, {pipeline_mode = #tpu.pipeline_mode<synchronous>, transform_indices = @transform_3, window_bounds = array<i64: 1, 128>}, {transform_indices = @transform_4, window_bounds = array<i64: 512, 128>}]} {
    %c0 = arith.constant 0 : index
    %c0_0 = arith.constant 0 : index
    %0 = vector.load %arg1[%c0, %c0_0] : memref<512x36xbf16, #tpu.memory_space<vmem>>, vector<512x36xbf16>
    %c0_1 = arith.constant 0 : index
    %c0_2 = arith.constant 0 : index
    %1 = vector.load %arg2[%c0_1, %c0_2] : memref<36x128xbf16, #tpu.memory_space<vmem>>, vector<36x128xbf16>
    %cst = arith.constant dense<0.000000e+00> : vector<512x128xf32>
    %2 = tpu.matmul %0, %1, %cst {dimension_numbers = #tpu.dot_dimension_numbers<[1], [0], [0], [1], [0, 0, 1, 1], [], []>} : vector<512x36xbf16>, vector<36x128xbf16>, vector<512x128xf32> -> vector<512x128xf32>
    %c0_3 = arith.constant 0 : index
    %c0_4 = arith.constant 0 : index
    %3 = vector.load %arg3[%c0_3, %c0_4] : memref<1x128xf32, #tpu.memory_space<vmem>>, vector<1x128xf32>
    %4 = vector.broadcast %3 : vector<1x128xf32> to vector<512x128xf32>
    %5 = arith.mulf %2, %4 : vector<512x128xf32>
    %c0_5 = arith.constant 0 : index
    %c0_6 = arith.constant 0 : index
    %6 = vector.load %arg4[%c0_5, %c0_6] : memref<1x128xf32, #tpu.memory_space<vmem>>, vector<1x128xf32>
    %7 = vector.broadcast %6 : vector<1x128xf32> to vector<512x128xf32>
    %8 = arith.addf %5, %7 : vector<512x128xf32>
    %c0_7 = arith.constant 0 : index
    %c0_8 = arith.constant 0 : index
    %9 = vector.load %arg5[%c0_7, %c0_8] : memref<512x128xf32, #tpu.memory_space<vmem>>, vector<512x128xf32>
    tpu.vector_store %arg5[%c0_7, %c0_8], %8 {strides = array<i32>} : memref<512x128xf32, #tpu.memory_space<vmem>>, vector<512x128xf32>,
    return
  }
  func.func @transform_0(%arg0: i32) -> (i32, i32) {
    %c0_i32 = arith.constant 0 : i32
    %c0_i32_0 = arith.constant 0 : i32
    return %arg0, %c0_i32 : i32, i32
  }
  func.func @transform_1(%arg0: i32) -> (i32, i32) {
    %c0_i32 = arith.constant 0 : i32
    %c0_i32_0 = arith.constant 0 : i32
    %c0_i32_1 = arith.constant 0 : i32
    return %c0_i32, %c0_i32_0 : i32, i32
  }
  func.func @transform_2(%arg0: i32) -> (i32, i32) {
    %c0_i32 = arith.constant 0 : i32
    %c0_i32_0 = arith.constant 0 : i32
    %c0_i32_1 = arith.constant 0 : i32
    return %c0_i32, %c0_i32_0 : i32, i32
  }
  func.func @transform_3(%arg0: i32) -> (i32, i32) {
    %c0_i32 = arith.constant 0 : i32
    %c0_i32_0 = arith.constant 0 : i32
    %c0_i32_1 = arith.constant 0 : i32
    return %c0_i32, %c0_i32_0 : i32, i32
  }
  func.func @transform_4(%arg0: i32) -> (i32, i32) {
    %c0_i32 = arith.constant 0 : i32
    %c0_i32_0 = arith.constant 0 : i32
    return %arg0, %c0_i32 : i32, i32
  }
}

module attributes {stable_mosaic.version = 11 : i64} {
  func.func @_mm_stats_kernel(%arg0: i32, %arg1: memref<256x36xbf16, #tpu.memory_space<vmem>>, %arg2: memref<36x128xbf16, #tpu.memory_space<vmem>>, %arg3: memref<1x2x128xf32, #tpu.memory_space<vmem>>) attributes {dimension_semantics = [#tpu.dimension_semantics<parallel>], iteration_bounds = array<i64: 2>, scalar_prefetch = 0 : i64, scratch_operands = 0 : i64, tpu.core_type = #tpu.core_type<tc>, window_params = [{transform_indices = @transform_0, window_bounds = array<i64: 256, 36>}, {pipeline_mode = #tpu.pipeline_mode<synchronous>, transform_indices = @transform_1, window_bounds = array<i64: 36, 128>}, {transform_indices = @transform_2, window_bounds = array<i64: 1, 2, 128>}]} {
    %c0 = arith.constant 0 : index
    %c0_0 = arith.constant 0 : index
    %0 = vector.load %arg1[%c0, %c0_0] : memref<256x36xbf16, #tpu.memory_space<vmem>>, vector<256x36xbf16>
    %c0_1 = arith.constant 0 : index
    %c0_2 = arith.constant 0 : index
    %1 = vector.load %arg2[%c0_1, %c0_2] : memref<36x128xbf16, #tpu.memory_space<vmem>>, vector<36x128xbf16>
    %cst = arith.constant dense<0.000000e+00> : vector<256x128xf32>
    %2 = tpu.matmul %0, %1, %cst {dimension_numbers = #tpu.dot_dimension_numbers<[1], [0], [0], [1], [0, 0, 1, 1], [], []>} : vector<256x36xbf16>, vector<36x128xbf16>, vector<256x128xf32> -> vector<256x128xf32>
    %cst_3 = arith.constant dense<0.000000e+00> : vector<128xf32>
    %3 = vector.multi_reduction <add>, %2, %cst_3 [0] : vector<256x128xf32> to vector<128xf32>
    %4 = vector.shape_cast %3 : vector<128xf32> to vector<1x128xf32>
    %5 = arith.mulf %2, %2 : vector<256x128xf32>
    %cst_4 = arith.constant dense<0.000000e+00> : vector<128xf32>
    %6 = vector.multi_reduction <add>, %5, %cst_4 [0] : vector<256x128xf32> to vector<128xf32>
    %7 = vector.shape_cast %6 : vector<128xf32> to vector<1x128xf32>
    %8 = tpu.concatenate %4, %7 in 0 : vector<1x128xf32>, vector<1x128xf32> -> vector<2x128xf32>
    %9 = vector.shape_cast %8 : vector<2x128xf32> to vector<1x2x128xf32>
    %c0_5 = arith.constant 0 : index
    %c0_6 = arith.constant 0 : index
    %c0_7 = arith.constant 0 : index
    %10 = vector.load %arg3[%c0_5, %c0_6, %c0_7] : memref<1x2x128xf32, #tpu.memory_space<vmem>>, vector<1x2x128xf32>
    tpu.vector_store %arg3[%c0_5, %c0_6, %c0_7], %9 {strides = array<i32>} : memref<1x2x128xf32, #tpu.memory_space<vmem>>, vector<1x2x128xf32>,
    return
  }
  func.func @transform_0(%arg0: i32) -> (i32, i32) {
    %c0_i32 = arith.constant 0 : i32
    %c0_i32_0 = arith.constant 0 : i32
    return %arg0, %c0_i32 : i32, i32
  }
  func.func @transform_1(%arg0: i32) -> (i32, i32) {
    %c0_i32 = arith.constant 0 : i32
    %c0_i32_0 = arith.constant 0 : i32
    %c0_i32_1 = arith.constant 0 : i32
    return %c0_i32, %c0_i32_0 : i32, i32
  }
  func.func @transform_2(%arg0: i32) -> (i32, i32, i32) {
    %c0_i32 = arith.constant 0 : i32
    %c0_i32_0 = arith.constant 0 : i32
    %c0_i32_1 = arith.constant 0 : i32
    return %arg0, %c0_i32, %c0_i32_0 : i32, i32, i32
  }
}

</mosaic_0001>

<llo_original>
// kernel: conv2d_batchnorm.2
$region0: #{conv2d_batchnorm.2}
  #allocation0 [shape = 'u32[]', space=smem, size = 0x4, offset = 0x4, fixed_abs, tag = 'smem constant byte address 0x4 - core index']
  #allocation1 [shape = 'u32[72,128]{1,0:T(1,128)}', space=vmem, size = 0x9000, scoped, tag = 'internal scratch']
  %s0 = inlined_call_operand.vmem [shape: bf16[512,36], index: 0, kind: input, shape index: {}]
  %s1 = inlined_call_operand.vmem [shape: bf16[36,128], index: 1, kind: input, shape index: {}]
  %s2 = inlined_call_operand.vmem [shape: f32[2,2,128], index: 2, kind: output, shape index: {}]
  %s3 = sld [smem:[#allocation0]]
  $region41: #{conv2d_batchnorm.2} parent=0
    _
  %s5 = ssub.s32 1, %s3
  %s6 = scalar_select 0, %s5, %s3
  loop: start=0, step=1, limit=4
  $region2: #{conv2d_batchnorm.2} parent=0 // loop_pre_header
    _
  $region3: #{conv2d_batchnorm.2} parent=0 // loop_header
    %s8 = sphi 0, %s12
    %p9 = scmp.ge.s32.totalorder %s8, 4
    %s18 = sphi 0, %s20
    %s21 = sphi 0, %s18
    %s22 = sphi 0, %s21
    %s38 = sphi 0, %s22
    %s42 = sphi 0, %s42
    %s44 = sphi 0, %s42
    %s45 = sphi 0, %s44
    %s59 = sphi 0, %s45
    %s65 = sphi 0, %s67
    %s68 = sphi 0, %s65
    %s69 = sphi 0, %s68
    %s85 = sphi 0, %s69
  $region4: #{conv2d_batchnorm.2} parent=0 // loop_header_branch
    %11 = sbr.rel (%p9) target = $region8
  $region5: #{conv2d_batchnorm.2} parent=0 // loop_body
    %s13 = ssub.s32 %s8, 1
    %s14 = ssub.s32 %s8, 2
    %s15 = sadd.s32 %s8, 1
    %s16 = ssub.s32 %s8, %s15
    %p17 = scmp.eq.s32.totalorder %s16, 0
    %s19 = sadd.s32 %s18, 1
    %s20 = scalar_select %p17, %s18, %s19
    %p23 = pneg %p17
    %p24 = scmp.eq.s32.totalorder %s8, 1
    %p25 = por %p23, %p24
    %p26 = scmp.ne.s32.totalorder %s18, %s21
    %p27 = scmp.eq.s32.totalorder %s8, 0
    %p28 = por %p26, %p27
    %p29 = scmp.ne.s32.totalorder %s18, %s21
    %p30 = scmp.eq.s32.totalorder %s13, 1
    %p31 = por %p29, %p30
    %p32 = scmp.ne.s32.totalorder %s21, %s22
    %p33 = scmp.eq.s32.totalorder %s13, 0
    %p34 = por %p32, %p33
    %p35 = scmp.ne.s32.totalorder %s21, %s22
    %p36 = scmp.eq.s32.totalorder %s14, 1
    %p37 = por %p35, %p36
    %p39 = scmp.ne.s32.totalorder %s22, %s38
    %p40 = scmp.eq.s32.totalorder %s14, 0
    %p41 = por %p39, %p40
    %s43 = sadd.s32 %s42, 1
    %p46 = scmp.eq.s32.totalorder %s8, 1
    %p47 = scmp.ne.s32.totalorder %s42, %s44
    %p48 = scmp.eq.s32.totalorder %s8, 0
    %p49 = por %p47, %p48
    %p50 = scmp.ne.s32.totalorder %s42, %s44
    %p51 = scmp.eq.s32.totalorder %s13, 1
    %p52 = por %p50, %p51
    %p53 = scmp.ne.s32.totalorder %s44, %s45
    %p54 = scmp.eq.s32.totalorder %s13, 0
    %p55 = por %p53, %p54
    %p56 = scmp.ne.s32.totalorder %s44, %s45
    %p57 = scmp.eq.s32.totalorder %s14, 1
    %p58 = por %p56, %p57
    %p60 = scmp.ne.s32.totalorder %s45, %s59
    %p61 = scmp.eq.s32.totalorder %s14, 0
    %p62 = por %p60, %p61
    %s63 = ssub.s32 %s8, %s15
    %p64 = scmp.eq.s32.totalorder %s63, 0
    %s66 = sadd.s32 %s65, 1
    %s67 = scalar_select %p64, %s65, %s66
    %p70 = pneg %p64
    %p71 = scmp.eq.s32.totalorder %s8, 1
    %p72 = por %p70, %p71
    %p73 = scmp.ne.s32.totalorder %s65, %s68
    %p74 = scmp.eq.s32.totalorder %s8, 0
    %p75 = por %p73, %p74
    %p76 = scmp.ne.s32.totalorder %s65, %s68
    %p77 = scmp.eq.s32.totalorder %s13, 1
    %p78 = por %p76, %p77
    %p79 = scmp.ne.s32.totalorder %s68, %s69
    %p80 = scmp.eq.s32.totalorder %s13, 0
    %p81 = por %p79, %p80
    %p82 = scmp.ne.s32.totalorder %s68, %s69
    %p83 = scmp.eq.s32.totalorder %s14, 1
    %p84 = por %p82, %p83
    %p86 = scmp.ne.s32.totalorder %s69, %s85
    %p87 = scmp.eq.s32.totalorder %s14, 0
    %p88 = por %p86, %p87
    %p89 = scmp.le.s32.totalorder 1, %s8
    %p90 = scmp.lt.s32.totalorder %s8, 3
    %p91 = pnand %p89, %p90
    %p92 = pneg %p91
    // Predicated region
    $region9: #{conv2d_batchnorm.2} parent=5 // pred_check
      _
    $region10: #{conv2d_batchnorm.2} parent=5 // pred_check_branch
      %94 = sbr.rel (%p91) target = $region12
    $region11: #{conv2d_batchnorm.2} parent=5 // pred_region
      %s95 = ssub.s32 %s8, 1
      // Predicated region
      $region13: #{conv2d_batchnorm.2} parent=11 // pred_check
        %p96 = pneg %p55
      $region14: #{conv2d_batchnorm.2} parent=11 // pred_check_branch
        %98 = sbr.rel (%p96) target = $region16
      $region15: #{conv2d_batchnorm.2} parent=11 // pred_region
        _
      $region16: #{conv2d_batchnorm.2} parent=11 // pred_fallthru
        _
    $region12: #{conv2d_batchnorm.2} parent=5 // pred_fallthru
      _
    %p99 = scmp.lt.s32.totalorder %s8, 2
    // Predicated region
    $region17: #{conv2d_batchnorm.2} parent=5 // pred_check
      %p100 = pneg %p99
    $region18: #{conv2d_batchnorm.2} parent=5 // pred_check_branch
      %102 = sbr.rel (%p100) target = $region20
    $region19: #{conv2d_batchnorm.2} parent=5 // pred_region
      // Predicated region
      $region21: #{conv2d_batchnorm.2} parent=19 // pred_check
        %p103 = pneg %p28
      $region22: #{conv2d_batchnorm.2} parent=19 // pred_check_branch
        %105 = sbr.rel (%p103) target = $region24
      $region23: #{conv2d_batchnorm.2} parent=19 // pred_region
        %s106 = smul.u32 32, %s8
        %p107 = scmp.lt.s32.totalorder %s106, 63
        %s108 = scalar_select %p107, %s106, 63
        %s109 = smul.addr %s108, 4
        %s110 = scalar_lea.vmem %s0, %s109
        %s111 = smul.u32 32, %s8
      $region24: #{conv2d_batchnorm.2} parent=19 // pred_fallthru
        _
    $region20: #{conv2d_batchnorm.2} parent=5 // pred_fallthru
      _
    %p112 = scmp.le.s32.totalorder 1, %s8
    %p113 = scmp.lt.s32.totalorder %s8, 3
    %p114 = pnand %p112, %p113
    %p115 = pneg %p114
    // Predicated region
    $region25: #{conv2d_batchnorm.2} parent=5 // pred_check
      _
    $region26: #{conv2d_batchnorm.2} parent=5 // pred_check_branch
      %117 = sbr.rel (%p114) target = $region28
    $region27: #{conv2d_batchnorm.2} parent=5 // pred_region
      %s118 = ssub.s32 %s8, 1
      %s119 = smul.u32 32, %s13
      %p120 = scmp.lt.s32.totalorder %s119, 63
      %s121 = scalar_select %p120, %s119, 63
      %s122 = smul.addr %s121, 4
      %s123 = scalar_lea.vmem %s0, %s122
      %p124 = pneg %p34
      %p125 = pneg %p31
      %p126 = pneg %p55
      %p127 = pneg %p52
      %p128 = pneg %p81
      %p129 = pneg %p78
      %p130 = scmp.lt.s32.totalorder %s13, 1
      %s131 = scalar_select %p130, %s13, 1
      %s132 = smul.addr %s131, 2
      %s133 = scalar_lea.vmem %s2, %s132
      %s134 = smul.u32 32, %s13
      %p135 = scmp.lt.s32.totalorder %s134, 63
      %s136 = scalar_select %p135, %s134, 63
      %s137 = smul.addr %s136, 4
      %s138 = scalar_lea.vmem %s0, %s137
      %s139 = smul.u32 32, %s13
      %p140 = scmp.lt.s32.totalorder %s13, 1
      %s141 = scalar_select %p140, %s13, 1
      %s142 = smul.addr %s141, 2
      %s143 = scalar_lea.vmem %s2, %s142
      %v145 = vld [vmem:[%s138] sm:$0xf]
      %v146 = vld [vmem:[%s138 + $0x4] sm:$0xf]
      %v147 = vld [vmem:[%s138 + $0x8] sm:$0xf]
      %v148 = vld [vmem:[%s138 + $0xc] sm:$0xf]
      %v149 = vld [vmem:[%s138 + $0x10] sm:$0xf]
      %v150 = vld [vmem:[%s138 + $0x14] sm:$0xf]
      %v151 = vld [vmem:[%s138 + $0x18] sm:$0xf]
      %v152 = vld [vmem:[%s138 + $0x1c] sm:$0xf]
      %v153 = vld [vmem:[%s138 + $0x20] sm:$0xf]
      %v154 = vld [vmem:[%s138 + $0x24] sm:$0xf]
      %v155 = vld [vmem:[%s138 + $0x28] sm:$0xf]
      %v156 = vld [vmem:[%s138 + $0x2c] sm:$0xf]
      %v157 = vld [vmem:[%s138 + $0x30] sm:$0xf]
      %v158 = vld [vmem:[%s138 + $0x34] sm:$0xf]
      %v159 = vld [vmem:[%s138 + $0x38] sm:$0xf]
      %v160 = vld [vmem:[%s138 + $0x3c] sm:$0xf]
      %v161 = vld [vmem:[%s138 + $0x40] sm:$0xf]
      %v162 = vld [vmem:[%s138 + $0x44] sm:$0xf]
      %v163 = vld [vmem:[%s138 + $0x48] sm:$0xf]
      %v164 = vld [vmem:[%s138 + $0x4c] sm:$0xf]
      %v165 = vld [vmem:[%s138 + $0x50] sm:$0xf]
      %v166 = vld [vmem:[%s138 + $0x54] sm:$0xf]
      %v167 = vld [vmem:[%s138 + $0x58] sm:$0xf]
      %v168 = vld [vmem:[%s138 + $0x5c] sm:$0xf]
      %v169 = vld [vmem:[%s138 + $0x60] sm:$0xf]
      %v170 = vld [vmem:[%s138 + $0x64] sm:$0xf]
      %v171 = vld [vmem:[%s138 + $0x68] sm:$0xf]
      %v172 = vld [vmem:[%s138 + $0x6c] sm:$0xf]
      %v173 = vld [vmem:[%s138 + $0x70] sm:$0xf]
      %v174 = vld [vmem:[%s138 + $0x74] sm:$0xf]
      %v175 = vld [vmem:[%s138 + $0x78] sm:$0xf]
      %v176 = vld [vmem:[%s138 + $0x7c] sm:$0xf]
      %v177 = vld [vmem:[%s1] sm:$0xf]
      %v178 = vld [vmem:[%s1 + $0x4] sm:$0xf]
      %v179 = vld [vmem:[%s1 + $0x8] sm:$0xf]
      %v180 = vld [vmem:[%s1 + $0xc] sm:$0xf]
      %v181 = vld [vmem:[%s1 + $0x10] sm:$0x3]
      %v214 = vunpack.c.l.b16 %v145
      %v215 = vunpack.c.l.b16 %v146
      %v216 = vunpack.c.l.b16 %v147
      %v217 = vunpack.c.l.b16 %v148
      %v218 = vunpack.c.l.b16 %v149
      %v219 = vunpack.c.l.b16 %v150
      %v220 = vunpack.c.l.b16 %v151
      %v221 = vunpack.c.l.b16 %v152
      %v222 = vunpack.c.l.b16 %v153
      %v223 = vunpack.c.l.b16 %v154
      %v224 = vunpack.c.l.b16 %v155
      %v225 = vunpack.c.l.b16 %v156
      %v226 = vunpack.c.l.b16 %v157
      %v227 = vunpack.c.l.b16 %v158
      %v228 = vunpack.c.l.b16 %v159
      %v229 = vunpack.c.l.b16 %v160
      %v230 = vunpack.c.l.b16 %v161
      %v231 = vunpack.c.l.b16 %v162
      %v232 = vunpack.c.l.b16 %v163
      %v233 = vunpack.c.l.b16 %v164
      %v234 = vunpack.c.l.b16 %v165
      %v235 = vunpack.c.l.b16 %v166
      %v236 = vunpack.c.l.b16 %v167
      %v237 = vunpack.c.l.b16 %v168
      %v238 = vunpack.c.l.b16 %v169
      %v239 = vunpack.c.l.b16 %v170
      %v240 = vunpack.c.l.b16 %v171
      %v241 = vunpack.c.l.b16 %v172
      %v242 = vunpack.c.l.b16 %v173
      %v243 = vunpack.c.l.b16 %v174
      %v244 = vunpack.c.l.b16 %v175
      %v245 = vunpack.c.l.b16 %v176
      %v246 = vpack.c.b16 %v215, %v214
      %v247 = vpack.c.b16 %v217, %v216
      %v248 = vpack.c.b16 %v219, %v218
      %v249 = vpack.c.b16 %v221, %v220
      %v250 = vpack.c.b16 %v223, %v222
      %v251 = vpack.c.b16 %v225, %v224
      %v252 = vpack.c.b16 %v227, %v226
      %v253 = vpack.c.b16 %v229, %v228
      %v254 = vpack.c.b16 %v231, %v230
      %v255 = vpack.c.b16 %v233, %v232
      %v256 = vpack.c.b16 %v235, %v234
      %v257 = vpack.c.b16 %v237, %v236
      %v258 = vpack.c.b16 %v239, %v238
      %v259 = vpack.c.b16 %v241, %v240
      %v260 = vpack.c.b16 %v243, %v242
      %v261 = vpack.c.b16 %v245, %v244
      %v267 = vunpack.c.l.b16 %v177
      %v268 = vunpack.c.l.b16 %v178
      %v269 = vunpack.c.l.b16 %v179
      %v270 = vunpack.c.l.b16 %v180
      %v271 = vunpack.c.l.b16 %v181
      %v272 = vpack.c.b16 %v268, %v267
      %v273 = vpack.c.b16 %v270, %v269
      %v274 = vpack.c.b16 %v271, %v271
      %vm277 = vcmask 293888
      %v279 = vsel %vm277, %v246, 0
      %v282 = vsel %vm277, %v247, 0
      %v285 = vsel %vm277, %v248, 0
      %v288 = vsel %vm277, %v249, 0
      %v291 = vsel %vm277, %v250, 0
      %v294 = vsel %vm277, %v251, 0
      %v297 = vsel %vm277, %v252, 0
      %v300 = vsel %vm277, %v253, 0
      %v303 = vsel %vm277, %v254, 0
      %v306 = vsel %vm277, %v255, 0
      %v309 = vsel %vm277, %v256, 0
      %v312 = vsel %vm277, %v257, 0
      %v315 = vsel %vm277, %v258, 0
      %v318 = vsel %vm277, %v259, 0
      %v321 = vsel %vm277, %v260, 0
      %v324 = vsel %vm277, %v261, 0
      %vm326 = vcmask 1041408
      %v328 = vsel %vm326, %v274, 0
      %330 = vmatpush.bf16.msra.mxu0 0
      %331 = vmatpush.bf16.msra.mxu0 0
      %332 = vmatpush.bf16.msra.mxu0 0
      %333 = vmatpush.bf16.msra.mxu0 0
      %334 = vmatpush.bf16.msra.mxu0 0
      %335 = vmatpush.bf16.msra.mxu0 %v328
      %336 = vmatpush.bf16.msra.mxu0 %v273
      %337 = vmatpush.bf16.msra.mxu0 %v272
      %338 = vmatmul.bf16.gmra.mxu0 %v279
      %v339 = vpop.f32.mrf.mxu0
      %v340 = vadd.f32 0.0, %v339
      %v341 = vpop.f32.mrf.mxu0
      %v342 = vadd.f32 0.0, %v341
      %343 = vmatmul.bf16.gmra.mxu0 %v282
      %v344 = vpop.f32.mrf.mxu0
      %v345 = vadd.f32 0.0, %v344
      %v346 = vpop.f32.mrf.mxu0
      %v347 = vadd.f32 0.0, %v346
      %348 = vmatmul.bf16.gmra.mxu0 %v285
      %v349 = vpop.f32.mrf.mxu0
      %v350 = vadd.f32 0.0, %v349
      %v351 = vpop.f32.mrf.mxu0
      %v352 = vadd.f32 0.0, %v351
      %353 = vmatmul.bf16.gmra.mxu0 %v288
      %v354 = vpop.f32.mrf.mxu0
      %v355 = vadd.f32 0.0, %v354
      %v356 = vpop.f32.mrf.mxu0
      %v357 = vadd.f32 0.0, %v356
      %358 = vmatmul.bf16.gmra.mxu0 %v291
      %v359 = vpop.f32.mrf.mxu0
      %v360 = vadd.f32 0.0, %v359
      %v361 = vpop.f32.mrf.mxu0
      %v362 = vadd.f32 0.0, %v361
      %363 = vmatmul.bf16.gmra.mxu0 %v294
      %v364 = vpop.f32.mrf.mxu0
      %v365 = vadd.f32 0.0, %v364
      %v366 = vpop.f32.mrf.mxu0
      %v367 = vadd.f32 0.0, %v366
      %368 = vmatmul.bf16.gmra.mxu0 %v297
      %v369 = vpop.f32.mrf.mxu0
      %v370 = vadd.f32 0.0, %v369
      %v371 = vpop.f32.mrf.mxu0
      %v372 = vadd.f32 0.0, %v371
      %373 = vmatmul.bf16.gmra.mxu0 %v300
      %v374 = vpop.f32.mrf.mxu0
      %v375 = vadd.f32 0.0, %v374
      %v376 = vpop.f32.mrf.mxu0
      %v377 = vadd.f32 0.0, %v376
      %378 = vmatmul.bf16.gmra.mxu0 %v303
      %v379 = vpop.f32.mrf.mxu0
      %v380 = vadd.f32 0.0, %v379
      %v381 = vpop.f32.mrf.mxu0
      %v382 = vadd.f32 0.0, %v381
      %383 = vmatmul.bf16.gmra.mxu0 %v306
      %v384 = vpop.f32.mrf.mxu0
      %v385 = vadd.f32 0.0, %v384
      %v386 = vpop.f32.mrf.mxu0
      %v387 = vadd.f32 0.0, %v386
      %388 = vmatmul.bf16.gmra.mxu0 %v309
      %v389 = vpop.f32.mrf.mxu0
      %v390 = vadd.f32 0.0, %v389
      %v391 = vpop.f32.mrf.mxu0
      %v392 = vadd.f32 0.0, %v391
      %393 = vmatmul.bf16.gmra.mxu0 %v312
      %v394 = vpop.f32.mrf.mxu0
      %v395 = vadd.f32 0.0, %v394
      %v396 = vpop.f32.mrf.mxu0
      %v397 = vadd.f32 0.0, %v396
      %398 = vmatmul.bf16.gmra.mxu0 %v315
      %v399 = vpop.f32.mrf.mxu0
      %v400 = vadd.f32 0.0, %v399
      %v401 = vpop.f32.mrf.mxu0
      %v402 = vadd.f32 0.0, %v401
      %403 = vmatmul.bf16.gmra.mxu0 %v318
      %v404 = vpop.f32.mrf.mxu0
      %v405 = vadd.f32 0.0, %v404
      %v406 = vpop.f32.mrf.mxu0
      %v407 = vadd.f32 0.0, %v406
      %408 = vmatmul.bf16.gmra.mxu0 %v321
      %v409 = vpop.f32.mrf.mxu0
      %v410 = vadd.f32 0.0, %v409
      %v411 = vpop.f32.mrf.mxu0
      %v412 = vadd.f32 0.0, %v411
      %413 = vmatmul.bf16.gmra.mxu0 %v324
      %v414 = vpop.f32.mrf.mxu0
      %v415 = vadd.f32 0.0, %v414
      %v416 = vpop.f32.mrf.mxu0
      %v417 = vadd.f32 0.0, %v416
      %418 = vdwg.mxu0
      %v419 = vadd.f32 %v340, %v342
      %v420 = vadd.f32 %v419, %v345
      %v421 = vadd.f32 %v420, %v347
      %v422 = vadd.f32 %v421, %v350
      %v423 = vadd.f32 %v422, %v352
      %v424 = vadd.f32 %v423, %v355
      %v425 = vadd.f32 %v424, %v357
      %v426 = vadd.f32 %v425, %v360
      %v427 = vadd.f32 %v426, %v362
      %v428 = vadd.f32 %v427, %v365
      %v429 = vadd.f32 %v428, %v367
      %v430 = vadd.f32 %v429, %v370
      %v431 = vadd.f32 %v430, %v372
      %v432 = vadd.f32 %v431, %v375
      %v433 = vadd.f32 %v432, %v377
      %v434 = vadd.f32 %v433, %v380
      %v435 = vadd.f32 %v434, %v382
      %v436 = vadd.f32 %v435, %v385
      %v437 = vadd.f32 %v436, %v387
      %v438 = vadd.f32 %v437, %v390
      %v439 = vadd.f32 %v438, %v392
      %v440 = vadd.f32 %v439, %v395
      %v441 = vadd.f32 %v440, %v397
      %v442 = vadd.f32 %v441, %v400
      %v443 = vadd.f32 %v442, %v402
      %v444 = vadd.f32 %v443, %v405
      %v445 = vadd.f32 %v444, %v407
      %v446 = vadd.f32 %v445, %v410
      %v447 = vadd.f32 %v446, %v412
      %v448 = vadd.f32 %v447, %v415
      %v449 = vadd.f32 %v448, %v417
      %v450 = vrot.slane %v449, 4
      %v451 = vadd.f32 %v449, %v450
      %v452 = vrot.slane %v451, 2
      %v453 = vadd.f32 %v451, %v452
      %v454 = vrot.slane %v453, 1
      %v455 = vadd.f32 %v453, %v454
      %v456 = vmul.f32 %v340, %v340
      %v457 = vmul.f32 %v342, %v342
      %v458 = vmul.f32 %v345, %v345
      %v459 = vmul.f32 %v347, %v347
      %v460 = vmul.f32 %v350, %v350
      %v461 = vmul.f32 %v352, %v352
      %v462 = vmul.f32 %v355, %v355
      %v463 = vmul.f32 %v357, %v357
      %v464 = vmul.f32 %v360, %v360
      %v465 = vmul.f32 %v362, %v362
      %v466 = vmul.f32 %v365, %v365
      %v467 = vmul.f32 %v367, %v367
      %v468 = vmul.f32 %v370, %v370
      %v469 = vmul.f32 %v372, %v372
      %v470 = vmul.f32 %v375, %v375
      %v471 = vmul.f32 %v377, %v377
      %v472 = vmul.f32 %v380, %v380
      %v473 = vmul.f32 %v382, %v382
      %v474 = vmul.f32 %v385, %v385
      %v475 = vmul.f32 %v387, %v387
      %v476 = vmul.f32 %v390, %v390
      %v477 = vmul.f32 %v392, %v392
      %v478 = vmul.f32 %v395, %v395
      %v479 = vmul.f32 %v397, %v397
      %v480 = vmul.f32 %v400, %v400
      %v481 = vmul.f32 %v402, %v402
      %v482 = vmul.f32 %v405, %v405
      %v483 = vmul.f32 %v407, %v407
      %v484 = vmul.f32 %v410, %v410
      %v485 = vmul.f32 %v412, %v412
      %v486 = vmul.f32 %v415, %v415
      %v487 = vmul.f32 %v417, %v417
      %v488 = vadd.f32 %v456, %v457
      %v489 = vadd.f32 %v488, %v458
      %v490 = vadd.f32 %v489, %v459
      %v491 = vadd.f32 %v490, %v460
      %v492 = vadd.f32 %v491, %v461
      %v493 = vadd.f32 %v492, %v462
      %v494 = vadd.f32 %v493, %v463
      %v495 = vadd.f32 %v494, %v464
      %v496 = vadd.f32 %v495, %v465
      %v497 = vadd.f32 %v496, %v466
      %v498 = vadd.f32 %v497, %v467
      %v499 = vadd.f32 %v498, %v468
      %v500 = vadd.f32 %v499, %v469
      %v501 = vadd.f32 %v500, %v470
      %v502 = vadd.f32 %v501, %v471
      %v503 = vadd.f32 %v502, %v472
      %v504 = vadd.f32 %v503, %v473
      %v505 = vadd.f32 %v504, %v474
      %v506 = vadd.f32 %v505, %v475
      %v507 = vadd.f32 %v506, %v476
      %v508 = vadd.f32 %v507, %v477
      %v509 = vadd.f32 %v508, %v478
      %v510 = vadd.f32 %v509, %v479
      %v511 = vadd.f32 %v510, %v480
      %v512 = vadd.f32 %v511, %v481
      %v513 = vadd.f32 %v512, %v482
      %v514 = vadd.f32 %v513, %v483
      %v515 = vadd.f32 %v514, %v484
      %v516 = vadd.f32 %v515, %v485
      %v517 = vadd.f32 %v516, %v486
      %v518 = vadd.f32 %v517, %v487
      %v519 = vrot.slane %v518, 4
      %v520 = vadd.f32 %v518, %v519
      %v521 = vrot.slane %v520, 2
      %v522 = vadd.f32 %v520, %v521
      %v523 = vrot.slane %v522, 1
      %v524 = vadd.f32 %v522, %v523
      %vm525 = vcmask 1040384
      %v526 = vsel %vm525, %v455, %v524
      %527 = vst [vmem:[%s143] sm:$0x3] %v526
      %p528 = scmp.lt.s32.totalorder %s13, 1
      %s529 = scalar_select %p528, %s13, 1
      %s530 = smul.addr %s529, 2
      %s531 = scalar_lea.vmem %s2, %s530
      // Predicated region
      $region29: #{conv2d_batchnorm.2} parent=27 // pred_check
        %p532 = pneg %p78
      $region30: #{conv2d_batchnorm.2} parent=27 // pred_check_branch
        %534 = sbr.rel (%p532) target = $region32
      $region31: #{conv2d_batchnorm.2} parent=27 // pred_region
        _
      $region32: #{conv2d_batchnorm.2} parent=27 // pred_fallthru
        _
    $region28: #{conv2d_batchnorm.2} parent=5 // pred_fallthru
      _
    %p535 = scmp.le.s32.totalorder 2, %s8
    // Predicated region
    $region33: #{conv2d_batchnorm.2} parent=5 // pred_check
      %p536 = pneg %p535
    $region34: #{conv2d_batchnorm.2} parent=5 // pred_check_branch
      %538 = sbr.rel (%p536) target = $region36
    $region35: #{conv2d_batchnorm.2} parent=5 // pred_region
      %s539 = ssub.s32 %s8, 2
      // Predicated region
      $region37: #{conv2d_batchnorm.2} parent=35 // pred_check
        %p540 = pneg %p84
      $region38: #{conv2d_batchnorm.2} parent=35 // pred_check_branch
        %542 = sbr.rel (%p540) target = $region40
      $region39: #{conv2d_batchnorm.2} parent=35 // pred_region
        %p543 = scmp.lt.s32.totalorder %s14, 1
        %s544 = scalar_select %p543, %s14, 1
        %s545 = smul.addr %s544, 2
        %s546 = scalar_lea.vmem %s2, %s545
      $region40: #{conv2d_batchnorm.2} parent=35 // pred_fallthru
        _
    $region36: #{conv2d_batchnorm.2} parent=5 // pred_fallthru
      _
  $region6: #{conv2d_batchnorm.2} parent=0 // loop_footer
    %s12 = sadd.s32 1, %s8
  $region7: #{conv2d_batchnorm.2} parent=0 // loop_footer_branch
    %7 = sbr.rel target = $region3
  $region8: #{conv2d_batchnorm.2} parent=0 // loop_exit
    _

// kernel: conv2d_batchnorm.3
$region0: #{conv2d_batchnorm.3}
  #allocation0 [shape = 'u32[]', space=smem, size = 0x4, offset = 0x4, fixed_abs, tag = 'smem constant byte address 0x4 - core index']
  #allocation1 [shape = 'u32[72,128]{1,0:T(1,128)}', space=vmem, size = 0x9000, scoped, tag = 'internal scratch']
  %s0 = inlined_call_operand.vmem [shape: bf16[512,36], index: 0, kind: input, shape index: {}]
  %s1 = inlined_call_operand.vmem [shape: bf16[36,128], index: 1, kind: input, shape index: {}]
  %s2 = inlined_call_operand.vmem [shape: f32[1,128], index: 2, kind: input, shape index: {}]
  %s3 = inlined_call_operand.vmem [shape: f32[1,128], index: 3, kind: input, shape index: {}]
  %s4 = inlined_call_operand.vmem [shape: f32[512,128], index: 4, kind: output, shape index: {}]
  %s5 = sld [smem:[#allocation0]]
  $region26: #{conv2d_batchnorm.3} parent=0
    _
  %s7 = ssub.s32 1, %s5
  %s8 = scalar_select 0, %s7, %s5
  // Predicated region
  $region2: #{conv2d_batchnorm.3} parent=0 // pred_check
    _
  $region3: #{conv2d_batchnorm.3} parent=0 // pred_check_branch
    %10 = sbr.rel (0) target = $region5
  $region4: #{conv2d_batchnorm.3} parent=0 // pred_region
    _
  $region5: #{conv2d_batchnorm.3} parent=0 // pred_fallthru
    _
  // Predicated region
  $region6: #{conv2d_batchnorm.3} parent=0 // pred_check
    _
  $region7: #{conv2d_batchnorm.3} parent=0 // pred_check_branch
    %12 = sbr.rel (0) target = $region9
  $region8: #{conv2d_batchnorm.3} parent=0 // pred_region
    _
  $region9: #{conv2d_batchnorm.3} parent=0 // pred_fallthru
    _
  // Predicated region
  $region10: #{conv2d_batchnorm.3} parent=0 // pred_check
    _
  $region11: #{conv2d_batchnorm.3} parent=0 // pred_check_branch
    %14 = sbr.rel (0) target = $region13
  $region12: #{conv2d_batchnorm.3} parent=0 // pred_region
    _
  $region13: #{conv2d_batchnorm.3} parent=0 // pred_fallthru
    _
  // Predicated region
  $region14: #{conv2d_batchnorm.3} parent=0 // pred_check
    _
  $region15: #{conv2d_batchnorm.3} parent=0 // pred_check_branch
    %16 = sbr.rel (0) target = $region17
  $region16: #{conv2d_batchnorm.3} parent=0 // pred_region
    _
  $region17: #{conv2d_batchnorm.3} parent=0 // pred_fallthru
    _
  %v18 = vld [vmem:[%s0] sm:$0xf]
  %v19 = vld [vmem:[%s0 + $0x4] sm:$0xf]
  %v20 = vld [vmem:[%s0 + $0x8] sm:$0xf]
  %v21 = vld [vmem:[%s0 + $0xc] sm:$0xf]
  %v22 = vld [vmem:[%s0 + $0x10] sm:$0xf]
  %v23 = vld [vmem:[%s0 + $0x14] sm:$0xf]
  %v24 = vld [vmem:[%s0 + $0x18] sm:$0xf]
  %v25 = vld [vmem:[%s0 + $0x1c] sm:$0xf]
  %v26 = vld [vmem:[%s0 + $0x20] sm:$0xf]
  %v27 = vld [vmem:[%s0 + $0x24] sm:$0xf]
  %v28 = vld [vmem:[%s0 + $0x28] sm:$0xf]
  %v29 = vld [vmem:[%s0 + $0x2c] sm:$0xf]
  %v30 = vld [vmem:[%s0 + $0x30] sm:$0xf]
  %v31 = vld [vmem:[%s0 + $0x34] sm:$0xf]
  %v32 = vld [vmem:[%s0 + $0x38] sm:$0xf]
  %v33 = vld [vmem:[%s0 + $0x3c] sm:$0xf]
  %v34 = vld [vmem:[%s0 + $0x40] sm:$0xf]
  %v35 = vld [vmem:[%s0 + $0x44] sm:$0xf]
  %v36 = vld [vmem:[%s0 + $0x48] sm:$0xf]
  %v37 = vld [vmem:[%s0 + $0x4c] sm:$0xf]
  %v38 = vld [vmem:[%s0 + $0x50] sm:$0xf]
  %v39 = vld [vmem:[%s0 + $0x54] sm:$0xf]
  %v40 = vld [vmem:[%s0 + $0x58] sm:$0xf]
  %v41 = vld [vmem:[%s0 + $0x5c] sm:$0xf]
  %v42 = vld [vmem:[%s0 + $0x60] sm:$0xf]
  %v43 = vld [vmem:[%s0 + $0x64] sm:$0xf]
  %v44 = vld [vmem:[%s0 + $0x68] sm:$0xf]
  %v45 = vld [vmem:[%s0 + $0x6c] sm:$0xf]
  %v46 = vld [vmem:[%s0 + $0x70] sm:$0xf]
  %v47 = vld [vmem:[%s0 + $0x74] sm:$0xf]
  %v48 = vld [vmem:[%s0 + $0x78] sm:$0xf]
  %v49 = vld [vmem:[%s0 + $0x7c] sm:$0xf]
  %v50 = vld [vmem:[%s0 + $0x80] sm:$0xf]
  %v51 = vld [vmem:[%s0 + $0x84] sm:$0xf]
  %v52 = vld [vmem:[%s0 + $0x88] sm:$0xf]
  %v53 = vld [vmem:[%s0 + $0x8c] sm:$0xf]
  %v54 = vld [vmem:[%s0 + $0x90] sm:$0xf]
  %v55 = vld [vmem:[%s0 + $0x94] sm:$0xf]
  %v56 = vld [vmem:[%s0 + $0x98] sm:$0xf]
  %v57 = vld [vmem:[%s0 + $0x9c] sm:$0xf]
  %v58 = vld [vmem:[%s0 + $0xa0] sm:$0xf]
  %v59 = vld [vmem:[%s0 + $0xa4] sm:$0xf]
  %v60 = vld [vmem:[%s0 + $0xa8] sm:$0xf]
  %v61 = vld [vmem:[%s0 + $0xac] sm:$0xf]
  %v62 = vld [vmem:[%s0 + $0xb0] sm:$0xf]
  %v63 = vld [vmem:[%s0 + $0xb4] sm:$0xf]
  %v64 = vld [vmem:[%s0 + $0xb8] sm:$0xf]
  %v65 = vld [vmem:[%s0 + $0xbc] sm:$0xf]
  %v66 = vld [vmem:[%s0 + $0xc0] sm:$0xf]
  %v67 = vld [vmem:[%s0 + $0xc4] sm:$0xf]
  %v68 = vld [vmem:[%s0 + $0xc8] sm:$0xf]
  %v69 = vld [vmem:[%s0 + $0xcc] sm:$0xf]
  %v70 = vld [vmem:[%s0 + $0xd0] sm:$0xf]
  %v71 = vld [vmem:[%s0 + $0xd4] sm:$0xf]
  %v72 = vld [vmem:[%s0 + $0xd8] sm:$0xf]
  %v73 = vld [vmem:[%s0 + $0xdc] sm:$0xf]
  %v74 = vld [vmem:[%s0 + $0xe0] sm:$0xf]
  %v75 = vld [vmem:[%s0 + $0xe4] sm:$0xf]
  %v76 = vld [vmem:[%s0 + $0xe8] sm:$0xf]
  %v77 = vld [vmem:[%s0 + $0xec] sm:$0xf]
  %v78 = vld [vmem:[%s0 + $0xf0] sm:$0xf]
  %v79 = vld [vmem:[%s0 + $0xf4] sm:$0xf]
  %v80 = vld [vmem:[%s0 + $0xf8] sm:$0xf]
  %v81 = vld [vmem:[%s0 + $0xfc] sm:$0xf]
  %v82 = vld [vmem:[%s1] sm:$0xf]
  %v83 = vld [vmem:[%s1 + $0x4] sm:$0xf]
  %v84 = vld [vmem:[%s1 + $0x8] sm:$0xf]
  %v85 = vld [vmem:[%s1 + $0xc] sm:$0xf]
  %v86 = vld [vmem:[%s1 + $0x10] sm:$0x3]
  %v151 = vunpack.c.l.b16 %v18
  %v152 = vunpack.c.l.b16 %v19
  %v153 = vunpack.c.l.b16 %v20
  %v154 = vunpack.c.l.b16 %v21
  %v155 = vunpack.c.l.b16 %v22
  %v156 = vunpack.c.l.b16 %v23
  %v157 = vunpack.c.l.b16 %v24
  %v158 = vunpack.c.l.b16 %v25
  %v159 = vunpack.c.l.b16 %v26
  %v160 = vunpack.c.l.b16 %v27
  %v161 = vunpack.c.l.b16 %v28
  %v162 = vunpack.c.l.b16 %v29
  %v163 = vunpack.c.l.b16 %v30
  %v164 = vunpack.c.l.b16 %v31
  %v165 = vunpack.c.l.b16 %v32
  %v166 = vunpack.c.l.b16 %v33
  %v167 = vunpack.c.l.b16 %v34
  %v168 = vunpack.c.l.b16 %v35
  %v169 = vunpack.c.l.b16 %v36
  %v170 = vunpack.c.l.b16 %v37
  %v171 = vunpack.c.l.b16 %v38
  %v172 = vunpack.c.l.b16 %v39
  %v173 = vunpack.c.l.b16 %v40
  %v174 = vunpack.c.l.b16 %v41
  %v175 = vunpack.c.l.b16 %v42
  %v176 = vunpack.c.l.b16 %v43
  %v177 = vunpack.c.l.b16 %v44
  %v178 = vunpack.c.l.b16 %v45
  %v179 = vunpack.c.l.b16 %v46
  %v180 = vunpack.c.l.b16 %v47
  %v181 = vunpack.c.l.b16 %v48
  %v182 = vunpack.c.l.b16 %v49
  %v183 = vunpack.c.l.b16 %v50
  %v184 = vunpack.c.l.b16 %v51
  %v185 = vunpack.c.l.b16 %v52
  %v186 = vunpack.c.l.b16 %v53
  %v187 = vunpack.c.l.b16 %v54
  %v188 = vunpack.c.l.b16 %v55
  %v189 = vunpack.c.l.b16 %v56
  %v190 = vunpack.c.l.b16 %v57
  %v191 = vunpack.c.l.b16 %v58
  %v192 = vunpack.c.l.b16 %v59
  %v193 = vunpack.c.l.b16 %v60
  %v194 = vunpack.c.l.b16 %v61
  %v195 = vunpack.c.l.b16 %v62
  %v196 = vunpack.c.l.b16 %v63
  %v197 = vunpack.c.l.b16 %v64
  %v198 = vunpack.c.l.b16 %v65
  %v199 = vunpack.c.l.b16 %v66
  %v200 = vunpack.c.l.b16 %v67
  %v201 = vunpack.c.l.b16 %v68
  %v202 = vunpack.c.l.b16 %v69
  %v203 = vunpack.c.l.b16 %v70
  %v204 = vunpack.c.l.b16 %v71
  %v205 = vunpack.c.l.b16 %v72
  %v206 = vunpack.c.l.b16 %v73
  %v207 = vunpack.c.l.b16 %v74
  %v208 = vunpack.c.l.b16 %v75
  %v209 = vunpack.c.l.b16 %v76
  %v210 = vunpack.c.l.b16 %v77
  %v211 = vunpack.c.l.b16 %v78
  %v212 = vunpack.c.l.b16 %v79
  %v213 = vunpack.c.l.b16 %v80
  %v214 = vunpack.c.l.b16 %v81
  %v215 = vpack.c.b16 %v152, %v151
  %v216 = vpack.c.b16 %v154, %v153
  %v217 = vpack.c.b16 %v156, %v155
  %v218 = vpack.c.b16 %v158, %v157
  %v219 = vpack.c.b16 %v160, %v159
  %v220 = vpack.c.b16 %v162, %v161
  %v221 = vpack.c.b16 %v164, %v163
  %v222 = vpack.c.b16 %v166, %v165
  %v223 = vpack.c.b16 %v168, %v167
  %v224 = vpack.c.b16 %v170, %v169
  %v225 = vpack.c.b16 %v172, %v171
  %v226 = vpack.c.b16 %v174, %v173
  %v227 = vpack.c.b16 %v176, %v175
  %v228 = vpack.c.b16 %v178, %v177
  %v229 = vpack.c.b16 %v180, %v179
  %v230 = vpack.c.b16 %v182, %v181
  %v231 = vpack.c.b16 %v184, %v183
  %v232 = vpack.c.b16 %v186, %v185
  %v233 = vpack.c.b16 %v188, %v187
  %v234 = vpack.c.b16 %v190, %v189
  %v235 = vpack.c.b16 %v192, %v191
  %v236 = vpack.c.b16 %v194, %v193
  %v237 = vpack.c.b16 %v196, %v195
  %v238 = vpack.c.b16 %v198, %v197
  %v239 = vpack.c.b16 %v200, %v199
  %v240 = vpack.c.b16 %v202, %v201
  %v241 = vpack.c.b16 %v204, %v203
  %v242 = vpack.c.b16 %v206, %v205
  %v243 = vpack.c.b16 %v208, %v207
  %v244 = vpack.c.b16 %v210, %v209
  %v245 = vpack.c.b16 %v212, %v211
  %v246 = vpack.c.b16 %v214, %v213
  %v252 = vunpack.c.l.b16 %v82
  %v253 = vunpack.c.l.b16 %v83
  %v254 = vunpack.c.l.b16 %v84
  %v255 = vunpack.c.l.b16 %v85
  %v256 = vunpack.c.l.b16 %v86
  %v257 = vpack.c.b16 %v253, %v252
  %v258 = vpack.c.b16 %v255, %v254
  %v259 = vpack.c.b16 %v256, %v256
  %vm262 = vcmask 293888
  %v264 = vsel %vm262, %v215, 0
  %v267 = vsel %vm262, %v216, 0
  %v270 = vsel %vm262, %v217, 0
  %v273 = vsel %vm262, %v218, 0
  %v276 = vsel %vm262, %v219, 0
  %v279 = vsel %vm262, %v220, 0
  %v282 = vsel %vm262, %v221, 0
  %v285 = vsel %vm262, %v222, 0
  %v288 = vsel %vm262, %v223, 0
  %v291 = vsel %vm262, %v224, 0
  %v294 = vsel %vm262, %v225, 0
  %v297 = vsel %vm262, %v226, 0
  %v300 = vsel %vm262, %v227, 0
  %v303 = vsel %vm262, %v228, 0
  %v306 = vsel %vm262, %v229, 0
  %v309 = vsel %vm262, %v230, 0
  %v312 = vsel %vm262, %v231, 0
  %v315 = vsel %vm262, %v232, 0
  %v318 = vsel %vm262, %v233, 0
  %v321 = vsel %vm262, %v234, 0
  %v324 = vsel %vm262, %v235, 0
  %v327 = vsel %vm262, %v236, 0
  %v330 = vsel %vm262, %v237, 0
  %v333 = vsel %vm262, %v238, 0
  %v336 = vsel %vm262, %v239, 0
  %v339 = vsel %vm262, %v240, 0
  %v342 = vsel %vm262, %v241, 0
  %v345 = vsel %vm262, %v242, 0
  %v348 = vsel %vm262, %v243, 0
  %v351 = vsel %vm262, %v244, 0
  %v354 = vsel %vm262, %v245, 0
  %v357 = vsel %vm262, %v246, 0
  %vm359 = vcmask 1041408
  %v361 = vsel %vm359, %v259, 0
  %363 = vmatpush.bf16.msra.mxu0 0
  %364 = vmatpush.bf16.msra.mxu0 0
  %365 = vmatpush.bf16.msra.mxu0 0
  %366 = vmatpush.bf16.msra.mxu0 0
  %367 = vmatpush.bf16.msra.mxu0 0
  %368 = vmatpush.bf16.msra.mxu0 %v361
  %369 = vmatpush.bf16.msra.mxu0 %v258
  %370 = vmatpush.bf16.msra.mxu0 %v257
  %371 = vmatmul.bf16.gmra.mxu0 %v264
  %v372 = vpop.f32.mrf.mxu0
  %v373 = vadd.f32 0.0, %v372
  %v374 = vpop.f32.mrf.mxu0
  %v375 = vadd.f32 0.0, %v374
  %376 = vmatmul.bf16.gmra.mxu0 %v267
  %v377 = vpop.f32.mrf.mxu0
  %v378 = vadd.f32 0.0, %v377
  %v379 = vpop.f32.mrf.mxu0
  %v380 = vadd.f32 0.0, %v379
  %381 = vmatmul.bf16.gmra.mxu0 %v270
  %v382 = vpop.f32.mrf.mxu0
  %v383 = vadd.f32 0.0, %v382
  %v384 = vpop.f32.mrf.mxu0
  %v385 = vadd.f32 0.0, %v384
  %386 = vmatmul.bf16.gmra.mxu0 %v273
  %v387 = vpop.f32.mrf.mxu0
  %v388 = vadd.f32 0.0, %v387
  %v389 = vpop.f32.mrf.mxu0
  %v390 = vadd.f32 0.0, %v389
  %391 = vmatmul.bf16.gmra.mxu0 %v276
  %v392 = vpop.f32.mrf.mxu0
  %v393 = vadd.f32 0.0, %v392
  %v394 = vpop.f32.mrf.mxu0
  %v395 = vadd.f32 0.0, %v394
  %396 = vmatmul.bf16.gmra.mxu0 %v279
  %v397 = vpop.f32.mrf.mxu0
  %v398 = vadd.f32 0.0, %v397
  %v399 = vpop.f32.mrf.mxu0
  %v400 = vadd.f32 0.0, %v399
  %401 = vmatmul.bf16.gmra.mxu0 %v282
  %v402 = vpop.f32.mrf.mxu0
  %v403 = vadd.f32 0.0, %v402
  %v404 = vpop.f32.mrf.mxu0
  %v405 = vadd.f32 0.0, %v404
  %406 = vmatmul.bf16.gmra.mxu0 %v285
  %v407 = vpop.f32.mrf.mxu0
  %v408 = vadd.f32 0.0, %v407
  %v409 = vpop.f32.mrf.mxu0
  %v410 = vadd.f32 0.0, %v409
  %411 = vmatmul.bf16.gmra.mxu0 %v288
  %v412 = vpop.f32.mrf.mxu0
  %v413 = vadd.f32 0.0, %v412
  %v414 = vpop.f32.mrf.mxu0
  %v415 = vadd.f32 0.0, %v414
  %416 = vmatmul.bf16.gmra.mxu0 %v291
  %v417 = vpop.f32.mrf.mxu0
  %v418 = vadd.f32 0.0, %v417
  %v419 = vpop.f32.mrf.mxu0
  %v420 = vadd.f32 0.0, %v419
  %421 = vmatmul.bf16.gmra.mxu0 %v294
  %v422 = vpop.f32.mrf.mxu0
  %v423 = vadd.f32 0.0, %v422
  %v424 = vpop.f32.mrf.mxu0
  %v425 = vadd.f32 0.0, %v424
  %426 = vmatmul.bf16.gmra.mxu0 %v297
  %v427 = vpop.f32.mrf.mxu0
  %v428 = vadd.f32 0.0, %v427
  %v429 = vpop.f32.mrf.mxu0
  %v430 = vadd.f32 0.0, %v429
  %431 = vmatmul.bf16.gmra.mxu0 %v300
  %v432 = vpop.f32.mrf.mxu0
  %v433 = vadd.f32 0.0, %v432
  %v434 = vpop.f32.mrf.mxu0
  %v435 = vadd.f32 0.0, %v434
  %436 = vmatmul.bf16.gmra.mxu0 %v303
  %v437 = vpop.f32.mrf.mxu0
  %v438 = vadd.f32 0.0, %v437
  %v439 = vpop.f32.mrf.mxu0
  %v440 = vadd.f32 0.0, %v439
  %441 = vmatmul.bf16.gmra.mxu0 %v306
  %v442 = vpop.f32.mrf.mxu0
  %v443 = vadd.f32 0.0, %v442
  %v444 = vpop.f32.mrf.mxu0
  %v445 = vadd.f32 0.0, %v444
  %446 = vmatmul.bf16.gmra.mxu0 %v309
  %v447 = vpop.f32.mrf.mxu0
  %v448 = vadd.f32 0.0, %v447
  %v449 = vpop.f32.mrf.mxu0
  %v450 = vadd.f32 0.0, %v449
  %451 = vmatmul.bf16.gmra.mxu0 %v312
  %v452 = vpop.f32.mrf.mxu0
  %v453 = vadd.f32 0.0, %v452
  %v454 = vpop.f32.mrf.mxu0
  %v455 = vadd.f32 0.0, %v454
  %456 = vmatmul.bf16.gmra.mxu0 %v315
  %v457 = vpop.f32.mrf.mxu0
  %v458 = vadd.f32 0.0, %v457
  %v459 = vpop.f32.mrf.mxu0
  %v460 = vadd.f32 0.0, %v459
  %461 = vmatmul.bf16.gmra.mxu0 %v318
  %v462 = vpop.f32.mrf.mxu0
  %v463 = vadd.f32 0.0, %v462
  %v464 = vpop.f32.mrf.mxu0
  %v465 = vadd.f32 0.0, %v464
  %466 = vmatmul.bf16.gmra.mxu0 %v321
  %v467 = vpop.f32.mrf.mxu0
  %v468 = vadd.f32 0.0, %v467
  %v469 = vpop.f32.mrf.mxu0
  %v470 = vadd.f32 0.0, %v469
  %471 = vmatmul.bf16.gmra.mxu0 %v324
  %v472 = vpop.f32.mrf.mxu0
  %v473 = vadd.f32 0.0, %v472
  %v474 = vpop.f32.mrf.mxu0
  %v475 = vadd.f32 0.0, %v474
  %476 = vmatmul.bf16.gmra.mxu0 %v327
  %v477 = vpop.f32.mrf.mxu0
  %v478 = vadd.f32 0.0, %v477
  %v479 = vpop.f32.mrf.mxu0
  %v480 = vadd.f32 0.0, %v479
  %481 = vmatmul.bf16.gmra.mxu0 %v330
  %v482 = vpop.f32.mrf.mxu0
  %v483 = vadd.f32 0.0, %v482
  %v484 = vpop.f32.mrf.mxu0
  %v485 = vadd.f32 0.0, %v484
  %486 = vmatmul.bf16.gmra.mxu0 %v333
  %v487 = vpop.f32.mrf.mxu0
  %v488 = vadd.f32 0.0, %v487
  %v489 = vpop.f32.mrf.mxu0
  %v490 = vadd.f32 0.0, %v489
  %491 = vmatmul.bf16.gmra.mxu0 %v336
  %v492 = vpop.f32.mrf.mxu0
  %v493 = vadd.f32 0.0, %v492
  %v494 = vpop.f32.mrf.mxu0
  %v495 = vadd.f32 0.0, %v494
  %496 = vmatmul.bf16.gmra.mxu0 %v339
  %v497 = vpop.f32.mrf.mxu0
  %v498 = vadd.f32 0.0, %v497
  %v499 = vpop.f32.mrf.mxu0
  %v500 = vadd.f32 0.0, %v499
  %501 = vmatmul.bf16.gmra.mxu0 %v342
  %v502 = vpop.f32.mrf.mxu0
  %v503 = vadd.f32 0.0, %v502
  %v504 = vpop.f32.mrf.mxu0
  %v505 = vadd.f32 0.0, %v504
  %506 = vmatmul.bf16.gmra.mxu0 %v345
  %v507 = vpop.f32.mrf.mxu0
  %v508 = vadd.f32 0.0, %v507
  %v509 = vpop.f32.mrf.mxu0
  %v510 = vadd.f32 0.0, %v509
  %511 = vmatmul.bf16.gmra.mxu0 %v348
  %v512 = vpop.f32.mrf.mxu0
  %v513 = vadd.f32 0.0, %v512
  %v514 = vpop.f32.mrf.mxu0
  %v515 = vadd.f32 0.0, %v514
  %516 = vmatmul.bf16.gmra.mxu0 %v351
  %v517 = vpop.f32.mrf.mxu0
  %v518 = vadd.f32 0.0, %v517
  %v519 = vpop.f32.mrf.mxu0
  %v520 = vadd.f32 0.0, %v519
  %521 = vmatmul.bf16.gmra.mxu0 %v354
  %v522 = vpop.f32.mrf.mxu0
  %v523 = vadd.f32 0.0, %v522
  %v524 = vpop.f32.mrf.mxu0
  %v525 = vadd.f32 0.0, %v524
  %526 = vmatmul.bf16.gmra.mxu0 %v357
  %v527 = vpop.f32.mrf.mxu0
  %v528 = vadd.f32 0.0, %v527
  %v529 = vpop.f32.mrf.mxu0
  %v530 = vadd.f32 0.0, %v529
  %531 = vdwg.mxu0
  %v532 = vld [vmem:[%s2] sm:$0x1]
  %v534 = vperm.slane %v532, 0
  %v536 = vmul.f32 %v373, %v534
  %v537 = vmul.f32 %v375, %v534
  %v538 = vmul.f32 %v378, %v534
  %v539 = vmul.f32 %v380, %v534
  %v540 = vmul.f32 %v383, %v534
  %v541 = vmul.f32 %v385, %v534
  %v542 = vmul.f32 %v388, %v534
  %v543 = vmul.f32 %v390, %v534
  %v544 = vmul.f32 %v393, %v534
  %v545 = vmul.f32 %v395, %v534
  %v546 = vmul.f32 %v398, %v534
  %v547 = vmul.f32 %v400, %v534
  %v548 = vmul.f32 %v403, %v534
  %v549 = vmul.f32 %v405, %v534
  %v550 = vmul.f32 %v408, %v534
  %v551 = vmul.f32 %v410, %v534
  %v552 = vmul.f32 %v413, %v534
  %v553 = vmul.f32 %v415, %v534
  %v554 = vmul.f32 %v418, %v534
  %v555 = vmul.f32 %v420, %v534
  %v556 = vmul.f32 %v423, %v534
  %v557 = vmul.f32 %v425, %v534
  %v558 = vmul.f32 %v428, %v534
  %v559 = vmul.f32 %v430, %v534
  %v560 = vmul.f32 %v433, %v534
  %v561 = vmul.f32 %v435, %v534
  %v562 = vmul.f32 %v438, %v534
  %v563 = vmul.f32 %v440, %v534
  %v564 = vmul.f32 %v443, %v534
  %v565 = vmul.f32 %v445, %v534
  %v566 = vmul.f32 %v448, %v534
  %v567 = vmul.f32 %v450, %v534
  %v568 = vmul.f32 %v453, %v534
  %v569 = vmul.f32 %v455, %v534
  %v570 = vmul.f32 %v458, %v534
  %v571 = vmul.f32 %v460, %v534
  %v572 = vmul.f32 %v463, %v534
  %v573 = vmul.f32 %v465, %v534
  %v574 = vmul.f32 %v468, %v534
  %v575 = vmul.f32 %v470, %v534
  %v576 = vmul.f32 %v473, %v534
  %v577 = vmul.f32 %v475, %v534
  %v578 = vmul.f32 %v478, %v534
  %v579 = vmul.f32 %v480, %v534
  %v580 = vmul.f32 %v483, %v534
  %v581 = vmul.f32 %v485, %v534
  %v582 = vmul.f32 %v488, %v534
  %v583 = vmul.f32 %v490, %v534
  %v584 = vmul.f32 %v493, %v534
  %v585 = vmul.f32 %v495, %v534
  %v586 = vmul.f32 %v498, %v534
  %v587 = vmul.f32 %v500, %v534
  %v588 = vmul.f32 %v503, %v534
  %v589 = vmul.f32 %v505, %v534
  %v590 = vmul.f32 %v508, %v534
  %v591 = vmul.f32 %v510, %v534
  %v592 = vmul.f32 %v513, %v534
  %v593 = vmul.f32 %v515, %v534
  %v594 = vmul.f32 %v518, %v534
  %v595 = vmul.f32 %v520, %v534
  %v596 = vmul.f32 %v523, %v534
  %v597 = vmul.f32 %v525, %v534
  %v598 = vmul.f32 %v528, %v534
  %v599 = vmul.f32 %v530, %v534
  %v600 = vld [vmem:[%s3] sm:$0x1]
  %v602 = vperm.slane %v600, 0
  %v604 = vadd.f32 %v536, %v602
  %v605 = vadd.f32 %v537, %v602
  %v606 = vadd.f32 %v538, %v602
  %v607 = vadd.f32 %v539, %v602
  %v608 = vadd.f32 %v540, %v602
  %v609 = vadd.f32 %v541, %v602
  %v610 = vadd.f32 %v542, %v602
  %v611 = vadd.f32 %v543, %v602
  %v612 = vadd.f32 %v544, %v602
  %v613 = vadd.f32 %v545, %v602
  %v614 = vadd.f32 %v546, %v602
  %v615 = vadd.f32 %v547, %v602
  %v616 = vadd.f32 %v548, %v602
  %v617 = vadd.f32 %v549, %v602
  %v618 = vadd.f32 %v550, %v602
  %v619 = vadd.f32 %v551, %v602
  %v620 = vadd.f32 %v552, %v602
  %v621 = vadd.f32 %v553, %v602
  %v622 = vadd.f32 %v554, %v602
  %v623 = vadd.f32 %v555, %v602
  %v624 = vadd.f32 %v556, %v602
  %v625 = vadd.f32 %v557, %v602
  %v626 = vadd.f32 %v558, %v602
  %v627 = vadd.f32 %v559, %v602
  %v628 = vadd.f32 %v560, %v602
  %v629 = vadd.f32 %v561, %v602
  %v630 = vadd.f32 %v562, %v602
  %v631 = vadd.f32 %v563, %v602
  %v632 = vadd.f32 %v564, %v602
  %v633 = vadd.f32 %v565, %v602
  %v634 = vadd.f32 %v566, %v602
  %v635 = vadd.f32 %v567, %v602
  %v636 = vadd.f32 %v568, %v602
  %v637 = vadd.f32 %v569, %v602
  %v638 = vadd.f32 %v570, %v602
  %v639 = vadd.f32 %v571, %v602
  %v640 = vadd.f32 %v572, %v602
  %v641 = vadd.f32 %v573, %v602
  %v642 = vadd.f32 %v574, %v602
  %v643 = vadd.f32 %v575, %v602
  %v644 = vadd.f32 %v576, %v602
  %v645 = vadd.f32 %v577, %v602
  %v646 = vadd.f32 %v578, %v602
  %v647 = vadd.f32 %v579, %v602
  %v648 = vadd.f32 %v580, %v602
  %v649 = vadd.f32 %v581, %v602
  %v650 = vadd.f32 %v582, %v602
  %v651 = vadd.f32 %v583, %v602
  %v652 = vadd.f32 %v584, %v602
  %v653 = vadd.f32 %v585, %v602
  %v654 = vadd.f32 %v586, %v602
  %v655 = vadd.f32 %v587, %v602
  %v656 = vadd.f32 %v588, %v602
  %v657 = vadd.f32 %v589, %v602
  %v658 = vadd.f32 %v590, %v602
  %v659 = vadd.f32 %v591, %v602
  %v660 = vadd.f32 %v592, %v602
  %v661 = vadd.f32 %v593, %v602
  %v662 = vadd.f32 %v594, %v602
  %v663 = vadd.f32 %v595, %v602
  %v664 = vadd.f32 %v596, %v602
  %v665 = vadd.f32 %v597, %v602
  %v666 = vadd.f32 %v598, %v602
  %v667 = vadd.f32 %v599, %v602
  %668 = vst [vmem:[%s4] sm:$0xff] %v604
  %669 = vst [vmem:[%s4 + $0x8] sm:$0xff] %v605
  %670 = vst [vmem:[%s4 + $0x10] sm:$0xff] %v606
  %671 = vst [vmem:[%s4 + $0x18] sm:$0xff] %v607
  %672 = vst [vmem:[%s4 + $0x20] sm:$0xff] %v608
  %673 = vst [vmem:[%s4 + $0x28] sm:$0xff] %v609
  %674 = vst [vmem:[%s4 + $0x30] sm:$0xff] %v610
  %675 = vst [vmem:[%s4 + $0x38] sm:$0xff] %v611
  %676 = vst [vmem:[%s4 + $0x40] sm:$0xff] %v612
  %677 = vst [vmem:[%s4 + $0x48] sm:$0xff] %v613
  %678 = vst [vmem:[%s4 + $0x50] sm:$0xff] %v614
  %679 = vst [vmem:[%s4 + $0x58] sm:$0xff] %v615
  %680 = vst [vmem:[%s4 + $0x60] sm:$0xff] %v616
  %681 = vst [vmem:[%s4 + $0x68] sm:$0xff] %v617
  %682 = vst [vmem:[%s4 + $0x70] sm:$0xff] %v618
  %683 = vst [vmem:[%s4 + $0x78] sm:$0xff] %v619
  %684 = vst [vmem:[%s4 + $0x80] sm:$0xff] %v620
  %685 = vst [vmem:[%s4 + $0x88] sm:$0xff] %v621
  %686 = vst [vmem:[%s4 + $0x90] sm:$0xff] %v622
  %687 = vst [vmem:[%s4 + $0x98] sm:$0xff] %v623
  %688 = vst [vmem:[%s4 + $0xa0] sm:$0xff] %v624
  %689 = vst [vmem:[%s4 + $0xa8] sm:$0xff] %v625
  %690 = vst [vmem:[%s4 + $0xb0] sm:$0xff] %v626
  %691 = vst [vmem:[%s4 + $0xb8] sm:$0xff] %v627
  %692 = vst [vmem:[%s4 + $0xc0] sm:$0xff] %v628
  %693 = vst [vmem:[%s4 + $0xc8] sm:$0xff] %v629
  %694 = vst [vmem:[%s4 + $0xd0] sm:$0xff] %v630
  %695 = vst [vmem:[%s4 + $0xd8] sm:$0xff] %v631
  %696 = vst [vmem:[%s4 + $0xe0] sm:$0xff] %v632
  %697 = vst [vmem:[%s4 + $0xe8] sm:$0xff] %v633
  %698 = vst [vmem:[%s4 + $0xf0] sm:$0xff] %v634
  %699 = vst [vmem:[%s4 + $0xf8] sm:$0xff] %v635
  %700 = vst [vmem:[%s4 + $0x100] sm:$0xff] %v636
  %701 = vst [vmem:[%s4 + $0x108] sm:$0xff] %v637
  %702 = vst [vmem:[%s4 + $0x110] sm:$0xff] %v638
  %703 = vst [vmem:[%s4 + $0x118] sm:$0xff] %v639
  %704 = vst [vmem:[%s4 + $0x120] sm:$0xff] %v640
  %705 = vst [vmem:[%s4 + $0x128] sm:$0xff] %v641
  %706 = vst [vmem:[%s4 + $0x130] sm:$0xff] %v642
  %707 = vst [vmem:[%s4 + $0x138] sm:$0xff] %v643
  %708 = vst [vmem:[%s4 + $0x140] sm:$0xff] %v644
  %709 = vst [vmem:[%s4 + $0x148] sm:$0xff] %v645
  %710 = vst [vmem:[%s4 + $0x150] sm:$0xff] %v646
  %711 = vst [vmem:[%s4 + $0x158] sm:$0xff] %v647
  %712 = vst [vmem:[%s4 + $0x160] sm:$0xff] %v648
  %713 = vst [vmem:[%s4 + $0x168] sm:$0xff] %v649
  %714 = vst [vmem:[%s4 + $0x170] sm:$0xff] %v650
  %715 = vst [vmem:[%s4 + $0x178] sm:$0xff] %v651
  %716 = vst [vmem:[%s4 + $0x180] sm:$0xff] %v652
  %717 = vst [vmem:[%s4 + $0x188] sm:$0xff] %v653
  %718 = vst [vmem:[%s4 + $0x190] sm:$0xff] %v654
  %719 = vst [vmem:[%s4 + $0x198] sm:$0xff] %v655
  %720 = vst [vmem:[%s4 + $0x1a0] sm:$0xff] %v656
  %721 = vst [vmem:[%s4 + $0x1a8] sm:$0xff] %v657
  %722 = vst [vmem:[%s4 + $0x1b0] sm:$0xff] %v658
  %723 = vst [vmem:[%s4 + $0x1b8] sm:$0xff] %v659
  %724 = vst [vmem:[%s4 + $0x1c0] sm:$0xff] %v660
  %725 = vst [vmem:[%s4 + $0x1c8] sm:$0xff] %v661
  %726 = vst [vmem:[%s4 + $0x1d0] sm:$0xff] %v662
  %727 = vst [vmem:[%s4 + $0x1d8] sm:$0xff] %v663
  %728 = vst [vmem:[%s4 + $0x1e0] sm:$0xff] %v664
  %729 = vst [vmem:[%s4 + $0x1e8] sm:$0xff] %v665
  %730 = vst [vmem:[%s4 + $0x1f0] sm:$0xff] %v666
  %731 = vst [vmem:[%s4 + $0x1f8] sm:$0xff] %v667
  // Predicated region
  $region18: #{conv2d_batchnorm.3} parent=0 // pred_check
    _
  $region19: #{conv2d_batchnorm.3} parent=0 // pred_check_branch
    %733 = sbr.rel (0) target = $region21
  $region20: #{conv2d_batchnorm.3} parent=0 // pred_region
    _
  $region21: #{conv2d_batchnorm.3} parent=0 // pred_fallthru
    _
  // Predicated region
  $region22: #{conv2d_batchnorm.3} parent=0 // pred_check
    _
  $region23: #{conv2d_batchnorm.3} parent=0 // pred_check_branch
    %735 = sbr.rel (0) target = $region25
  $region24: #{conv2d_batchnorm.3} parent=0 // pred_region
    _
  $region25: #{conv2d_batchnorm.3} parent=0 // pred_fallthru
    _

</llo_original>
